<compile_context>
chip_gen: v7x
topology: tpu7x:2x2x1
jax: 0.10.0
libtpu: 0.0.40
codegen_flags: <defaults>
</compile_context>

<pallas_src>
import math
from functools import partial

import jax
import jax.numpy as jnp
from jax.experimental import pallas as pl
from jax.experimental.pallas import tpu as pltpu


_VMEM_BUDGET = 48 * 1024 * 1024       # conservative vs v7x's 64 MiB physical VMEM


def _round_up(v, m):
    return ((v + m - 1) // m) * m


def _pad_to(arr, shape):
    pads = [(0, s - d) for d, s in zip(arr.shape, shape)]
    if any(hi for _, hi in pads):
        arr = jnp.pad(arr, pads)
    return arr


# --------------------- kernel 1: support = x @ W (bf16) ----------------------
def _support_kernel(x_ref, w_ref, o_ref):
    # x stays f32 in HBM; cast to bf16 on the fly for the MXU, f32 accumulation,
    # bf16 store (the slab is re-read by the aggregate kernel, so half traffic).
    o_ref[...] = jnp.dot(
        x_ref[...].astype(jnp.bfloat16), w_ref[...],
        preferred_element_type=jnp.float32).astype(o_ref.dtype)


def _compute_support(x_p, w_p, t):
    B, n_pad, f_in_pad = x_p.shape
    f_out_pad = w_p.shape[1]
    est = (2 * t * f_in_pad * 4          # x tiles (f32), double-buffered
           + 2 * f_in_pad * f_out_pad * 2  # weight (bf16)
           + 2 * t * f_out_pad * 2)        # support output tiles (bf16)
    return pl.pallas_call(
        _support_kernel,
        out_shape=jax.ShapeDtypeStruct((B, n_pad, f_out_pad), jnp.bfloat16),
        grid_spec=pltpu.PrefetchScalarGridSpec(
            num_scalar_prefetch=0,
            grid=(B, n_pad // t),
            in_specs=[
                pl.BlockSpec((None, t, f_in_pad), lambda b, i: (b, i, 0)),
                pl.BlockSpec((f_in_pad, f_out_pad), lambda b, i: (0, 0)),
            ],
            out_specs=pl.BlockSpec((None, t, f_out_pad), lambda b, i: (b, i, 0)),
        ),
        compiler_params=pltpu.CompilerParams(
            dimension_semantics=("parallel", "parallel"),
            vmem_limit_bytes=max(est + 8 * 1024 * 1024, 32 * 1024 * 1024),
        ),
    )(x_p, w_p)


# ------------------ kernel 2: output = adj @ support (+bias) -----------------
def _aggregate_kernel(*refs, has_bias, resident_slab, t):
    if has_bias:
        adj_ref, sup_ref, b_ref, o_ref = refs
    else:
        adj_ref, sup_ref, o_ref = refs
        b_ref = None

    # Reduction axis is ALWAYS grid axis 2 (innermost / "arbitrary"). The
    # resident output block + first-step init below rely on this ordering.
    k = pl.program_id(2)

    if resident_slab:
        # Per-batch support slab is resident in VMEM; pick this k-tile's rows.
        row = pl.multiple_of(k * t, 128)
        sup_k = sup_ref[pl.ds(row, t), :]
    else:
        sup_k = sup_ref[...]

    # adj streamed as f32 straight from HBM (no host pre-cast); cast the (t, t)
    # tile to bf16 in-registers right before the MXU dot. f32 accumulation.
    part = jnp.dot(adj_ref[...].astype(jnp.bfloat16), sup_k,
                   preferred_element_type=jnp.float32)

    # Accumulate directly into the resident f32 output block (no scratch, no
    # finalize copy, no zero-fill store on the first step).
    @pl.when(k == 0)
    def _first():
        o_ref[...] = part.astype(o_ref.dtype)

    @pl.when(k > 0)
    def _accumulate():
        o_ref[...] += part.astype(o_ref.dtype)

    if b_ref is not None:
        @pl.when(k == pl.num_programs(2) - 1)
        def _add_bias():
            o_ref[...] += b_ref[...].astype(o_ref.dtype)


def _aggregate_vmem(t, n_pad, f_out_pad, resident_slab, has_bias):
    est = 2 * t * t * 4                      # adj f32 tiles, double-buffered
    est += 2 * t * f_out_pad * 4             # f32 output block
    if resident_slab:
        est += 2 * n_pad * f_out_pad * 2     # bf16 support slab (per batch elem)
    else:
        est += 2 * t * f_out_pad * 2         # bf16 support k-tiles
    if has_bias:
        est += 2 * f_out_pad * 4
    return est


def graph_convolution(x, adj, weight, bias=None, *, block_n=512):
    """Pallas TPU implementation of GraphConvolution.forward.

    x:      (B, N, F_in)   float32
    adj:    (B, N, N)      float32
    weight: (F_in, F_out)  float32
    bias:   (1, 1, F_out)  float32 or None
    returns (B, N, F_out)  same dtype as x
    """
    B, N, F_in = x.shape
    F_out = weight.shape[1]
    has_bias = bias is not None

    # ---- padded / tiled sizes -------------------------------------------
    f_in_pad = _round_up(F_in, 8)
    f_out_pad = _round_up(F_out, 128)         # lane-dense stores / weight cols

    t = min(max(128, _round_up(block_n, 128)), _round_up(N, 128))
    while True:
        n_pad = _round_up(N, t)
        if _aggregate_vmem(t, n_pad, f_out_pad, True, has_bias) <= _VMEM_BUDGET:
            resident_slab = True
            break
        if _aggregate_vmem(t, n_pad, f_out_pad, False, has_bias) <= _VMEM_BUDGET:
            resident_slab = False
            break
        if t <= 128:
            resident_slab = False               # smallest tile; run anyway
            break
        t = max(128, (t // 2) // 128 * 128)
    n_pad = _round_up(N, t)
    est = _aggregate_vmem(t, n_pad, f_out_pad, resident_slab, has_bias)

    # ---- host-side prep (no dtype pre-pass over adj; pad only if needed) --
    x_p = _pad_to(x, (B, n_pad, f_in_pad))                      # f32
    adj_p = _pad_to(adj, (B, n_pad, n_pad))                     # f32, no cast
    w_p = _pad_to(weight, (f_in_pad, f_out_pad)).astype(jnp.bfloat16)

    # ---- support = x @ W, computed once, stored bf16 ----------------------
    support = _compute_support(x_p, w_p, t)     # (B, n_pad, f_out_pad) bf16

    # ---- aggregate: output = adj @ support (+ bias) ------------------------
    n_i = n_pad // t
    n_k = n_pad // t

    if B >= 2 or n_i == 1:
        # Batch leads: the resident support slab (index depends only on b) is
        # fetched exactly B times over the whole grid.
        grid = (B, n_i, n_k)

        def _bik(g0, g1, g2):
            return g0, g1, g2
    else:
        # B == 1 with several row tiles: lead with the row-tile axis so both
        # v7x TensorCores get work (no-op on single-TC v5e/v6e); the slab index
        # is constant for B == 1, so this adds no re-fetches.
        grid = (n_i, B, n_k)

        def _bik(g0, g1, g2):
            return g1, g0, g2

    def adj_map(g0, g1, g2):
        b, i, k = _bik(g0, g1, g2)
        return b, i, k

    def sup_map(g0, g1, g2):
        b, i, k = _bik(g0, g1, g2)
        return (b, 0, 0) if resident_slab else (b, k, 0)

    def out_map(g0, g1, g2):
        b, i, k = _bik(g0, g1, g2)
        return b, i, 0

    in_specs = [
        pl.BlockSpec((None, t, t), adj_map),            # adj: streamed f32 tiles
        pl.BlockSpec((None, n_pad, f_out_pad), sup_map) if resident_slab
        else pl.BlockSpec((None, t, f_out_pad), sup_map),
    ]
    args = [adj_p, support]
    if has_bias:
        bias_p = _pad_to(bias.astype(jnp.float32), (1, 1, f_out_pad))
        in_specs.append(pl.BlockSpec((None, 1, f_out_pad),
                                     lambda g0, g1, g2: (0, 0, 0)))
        args.append(bias_p)

    out_spec = pl.BlockSpec((None, t, f_out_pad), out_map)

    out = pl.pallas_call(
        partial(_aggregate_kernel, has_bias=has_bias,
                resident_slab=resident_slab, t=t),
        out_shape=jax.ShapeDtypeStruct((B, n_pad, f_out_pad), jnp.float32),
        grid_spec=pltpu.PrefetchScalarGridSpec(
            num_scalar_prefetch=0,
            grid=grid,
            in_specs=in_specs,
            out_specs=out_spec,
        ),
        compiler_params=pltpu.CompilerParams(
            dimension_semantics=("parallel", "parallel", "arbitrary"),
            vmem_limit_bytes=max(est + 8 * 1024 * 1024, 32 * 1024 * 1024),
        ),
    )(*args)

    # Strip padding, return in the input dtype.
    return out[:, :N, :F_out].astype(x.dtype)


def init_params(key, in_features, out_features, bias=False):
    """Deterministic init mirroring GraphConvolution.reset_parameters."""
    stdv = 1.0 / math.sqrt(out_features)
    kw, kb = jax.random.split(key)
    weight = jax.random.uniform(
        kw, (in_features, out_features), minval=-stdv, maxval=stdv,
        dtype=jnp.float32)
    b = None
    if bias:
        b = jax.random.uniform(
            kb, (1, 1, out_features), minval=-stdv, maxval=stdv,
            dtype=jnp.float32)
    return weight, b


if __name__ == "__main__":
    key = jax.random.PRNGKey(0)
    k_x, k_adj, k_p = jax.random.split(key, 3)

    B, N, F_in, F_out = 2, 8, 32, 16

    x = jax.random.normal(k_x, (B, N, F_in), dtype=jnp.float32)
    adj = jax.random.uniform(k_adj, (B, N, N), dtype=jnp.float32)

    def reference_bf16(x, adj, weight, bias):
        # Matches the kernel's numerics: bf16 MXU operands, f32 accumulation,
        # bf16-stored support.
        xb = x.astype(jnp.bfloat16)
        wb = weight.astype(jnp.bfloat16)
        ab = adj.astype(jnp.bfloat16)
        support = jnp.einsum("bnf,fo->bno", xb, wb,
                             preferred_element_type=jnp.float32)
        out = jnp.einsum("bnm,bmo->bno", ab, support.astype(jnp.bfloat16),
                         preferred_element_type=jnp.float32)
        if bias is not None:
            out = out + bias
        return out

    # ---- bias=False (module default) ----
    weight, _ = init_params(k_p, F_in, F_out, bias=False)
    out = graph_convolution(x, adj, weight, bias=None)
    jax.block_until_ready(out)
    assert out.shape == (B, N, F_out)
    ref = reference_bf16(x, adj, weight, None)
    assert jnp.allclose(out, ref, atol=2e-2, rtol=2e-2), "mismatch (no bias)"
    # Loose check vs the full-f32 PyTorch-equivalent reference (the only
    # difference is the bf16 cast of the MXU operands / stored support).
    ref_f32 = jnp.matmul(adj, jnp.matmul(x, weight))
    assert jnp.allclose(out, ref_f32, atol=0.25), "mismatch vs f32 reference"

    # ---- bias=True path ----
    weight_b, bias_b = init_params(k_p, F_in, F_out, bias=True)
    out_b = graph_convolution(x, adj, weight_b, bias=bias_b)
    jax.block_until_ready(out_b)
    ref_b = reference_bf16(x, adj, weight_b, bias_b)
    assert jnp.allclose(out_b, ref_b, atol=2e-2, rtol=2e-2), "mismatch (bias)"

    print("KERNEL_OK")
</pallas_src>

<mosaic_0001>
module attributes {stable_mosaic.version = 11 : i64} {
  func.func @_support_kernel(%arg0: i32, %arg1: i32, %arg2: memref<1x128x32xf32, #tpu.memory_space<vmem>>, %arg3: memref<32x128xbf16, #tpu.memory_space<vmem>>, %arg4: memref<1x128x128xbf16, #tpu.memory_space<vmem>>) attributes {dimension_semantics = [#tpu.dimension_semantics<parallel>, #tpu.dimension_semantics<parallel>], iteration_bounds = array<i64: 2, 1>, scalar_prefetch = 0 : i64, scratch_operands = 0 : i64, tpu.core_type = #tpu.core_type<tc>, window_params = [{transform_indices = @transform_0, window_bounds = array<i64: 1, 128, 32>}, {pipeline_mode = #tpu.pipeline_mode<synchronous>, transform_indices = @transform_1, window_bounds = array<i64: 32, 128>}, {transform_indices = @transform_2, window_bounds = array<i64: 1, 128, 128>}]} {
    %c0 = arith.constant 0 : index
    %c0_0 = arith.constant 0 : index
    %c0_1 = arith.constant 0 : index
    %0 = vector.load %arg2[%c0, %c0_0, %c0_1] : memref<1x128x32xf32, #tpu.memory_space<vmem>>, vector<1x128x32xf32>
    %1 = vector.shape_cast %0 : vector<1x128x32xf32> to vector<128x32xf32>
    %2 = arith.truncf %1 : vector<128x32xf32> to vector<128x32xbf16>
    %c0_2 = arith.constant 0 : index
    %c0_3 = arith.constant 0 : index
    %3 = vector.load %arg3[%c0_2, %c0_3] : memref<32x128xbf16, #tpu.memory_space<vmem>>, vector<32x128xbf16>
    %cst = arith.constant dense<0.000000e+00> : vector<128x128xf32>
    %4 = tpu.matmul %2, %3, %cst {dimension_numbers = #tpu.dot_dimension_numbers<[1], [0], [0], [1], [0, 0, 1, 1], [], []>} : vector<128x32xbf16>, vector<32x128xbf16>, vector<128x128xf32> -> vector<128x128xf32>
    %5 = arith.truncf %4 : vector<128x128xf32> to vector<128x128xbf16>
    %c0_4 = arith.constant 0 : index
    %c0_5 = arith.constant 0 : index
    %c0_6 = arith.constant 0 : index
    %6 = vector.load %arg4[%c0_4, %c0_5, %c0_6] : memref<1x128x128xbf16, #tpu.memory_space<vmem>>, vector<1x128x128xbf16>
    %7 = vector.shape_cast %6 : vector<1x128x128xbf16> to vector<128x128xbf16>
    %8 = vector.shape_cast %5 : vector<128x128xbf16> to vector<1x128x128xbf16>
    tpu.vector_store %arg4[%c0_4, %c0_5, %c0_6], %8 {strides = array<i32>} : memref<1x128x128xbf16, #tpu.memory_space<vmem>>, vector<1x128x128xbf16>,
    return
  }
  func.func @transform_0(%arg0: i32, %arg1: i32) -> (i32, i32, i32) {
    %c0_i32 = arith.constant 0 : i32
    %c0_i32_0 = arith.constant 0 : i32
    return %arg0, %arg1, %c0_i32 : i32, i32, i32
  }
  func.func @transform_1(%arg0: i32, %arg1: i32) -> (i32, i32) {
    %c0_i32 = arith.constant 0 : i32
    %c0_i32_0 = arith.constant 0 : i32
    %c0_i32_1 = arith.constant 0 : i32
    return %c0_i32, %c0_i32_0 : i32, i32
  }
  func.func @transform_2(%arg0: i32, %arg1: i32) -> (i32, i32, i32) {
    %c0_i32 = arith.constant 0 : i32
    %c0_i32_0 = arith.constant 0 : i32
    return %arg0, %arg1, %c0_i32 : i32, i32, i32
  }
}

</mosaic_0001>

<llo_original>
// kernel: tpu_custom_call.1
$region0: #{tpu_custom_call.1}
  #allocation0 [shape = 'u32[]', space=smem, size = 0x4, offset = 0x4, fixed_abs, tag = 'smem constant byte address 0x4 - core index']
  #allocation1 [shape = 'u32[144,128]{1,0:T(1,128)}', space=vmem, size = 0x12000, scoped, tag = 'internal scratch']
  %s0 = inlined_call_operand.vmem [shape: f32[2,128,32], index: 0, kind: input, shape index: {}]
  %s1 = inlined_call_operand.vmem [shape: bf16[32,128], index: 1, kind: input, shape index: {}]
  %s2 = inlined_call_operand.hbm [shape: bf16[2,128,128], index: 2, kind: output, shape index: {}]
  %s3 = sld [smem:[#allocation0]]
  $region41: #{tpu_custom_call.1} parent=0
    _
  %s5 = ssub.s32 1, %s3
  %s6 = scalar_select 0, %s5, %s3
  $region1: #{tpu_custom_call.1} parent=0
    #allocation2 [shape = 'u8[65536]{0}', space=vmem, size = 0x10000, scoped, tag = 'output window, operand 0']
    #allocation3 [shape = 's32[2]{0}', space=sflag, size = 0x8, scoped, tag = 'scoped memory for tpu_custom_call.1']
    %7 = vsyncpa [#allocation3], 0
    %s8 = scalar_lea.sflag [#allocation3], 1
    %9 = vsyncpa %s8, 0
    loop: start=0, step=1, limit=4
    $region2: #{tpu_custom_call.1} parent=1 // loop_pre_header
      _
    $region3: #{tpu_custom_call.1} parent=1 // loop_header
      %s11 = sphi 0, %s15
      %p12 = scmp.ge.s32.totalorder %s11, 4
      %s18 = sphi 0, %s30
      %s19 = sphi 0, %s26
      %s20 = sphi 0, %s18
      %s21 = sphi 0, %s19
      %s22 = sphi 0, %s20
      %s23 = sphi 0, %s21
      %s35 = sphi 0, %s37
      %s38 = sphi 0, %s35
      %s39 = sphi 0, %s38
      %s55 = sphi 0, %s39
      %s59 = sphi 0, %s59
      %s61 = sphi 0, %s59
      %s62 = sphi 0, %s61
      %s76 = sphi 0, %s62
      %s84 = sphi 0, %s86
      %s87 = sphi 0, %s84
      %s88 = sphi 0, %s87
      %s104 = sphi 0, %s88
    $region4: #{tpu_custom_call.1} parent=1 // loop_header_branch
      %14 = sbr.rel (%p12) target = $region8
    $region5: #{tpu_custom_call.1} parent=1 // loop_body
      %s16 = ssub.s32 %s11, 1
      %s17 = ssub.s32 %s11, 2
      %s24 = sadd.s32 1, %s19
      %p25 = scmp.ge.s32.totalorder %s24, 1
      %s26 = scalar_select %p25, 0, %s24
      %s27 = sadd.s32 1, %s18
      %s28 = scalar_select %p25, %s27, %s18
      %p29 = scmp.ge.s32.totalorder %s28, 2
      %s30 = scalar_select %p29, 0, %s28
      %s31 = ssub.s32 %s18, %s30
      %s32 = ssub.s32 %s19, %s26
      %s33 = sor.u32 %s31, %s32
      %p34 = scmp.eq.s32.totalorder %s33, 0
      %s36 = sadd.s32 %s35, 1
      %s37 = scalar_select %p34, %s35, %s36
      %p40 = pneg %p34
      %p41 = scmp.eq.s32.totalorder %s11, 1
      %p42 = por %p40, %p41
      %p43 = scmp.ne.s32.totalorder %s35, %s38
      %p44 = scmp.eq.s32.totalorder %s11, 0
      %p45 = por %p43, %p44
      %p46 = scmp.ne.s32.totalorder %s35, %s38
      %p47 = scmp.eq.s32.totalorder %s16, 1
      %p48 = por %p46, %p47
      %p49 = scmp.ne.s32.totalorder %s38, %s39
      %p50 = scmp.eq.s32.totalorder %s16, 0
      %p51 = por %p49, %p50
      %p52 = scmp.ne.s32.totalorder %s38, %s39
      %p53 = scmp.eq.s32.totalorder %s17, 1
      %p54 = por %p52, %p53
      %p56 = scmp.ne.s32.totalorder %s39, %s55
      %p57 = scmp.eq.s32.totalorder %s17, 0
      %p58 = por %p56, %p57
      %s60 = sadd.s32 %s59, 1
      %p63 = scmp.eq.s32.totalorder %s11, 1
      %p64 = scmp.ne.s32.totalorder %s59, %s61
      %p65 = scmp.eq.s32.totalorder %s11, 0
      %p66 = por %p64, %p65
      %p67 = scmp.ne.s32.totalorder %s59, %s61
      %p68 = scmp.eq.s32.totalorder %s16, 1
      %p69 = por %p67, %p68
      %p70 = scmp.ne.s32.totalorder %s61, %s62
      %p71 = scmp.eq.s32.totalorder %s16, 0
      %p72 = por %p70, %p71
      %p73 = scmp.ne.s32.totalorder %s61, %s62
      %p74 = scmp.eq.s32.totalorder %s17, 1
      %p75 = por %p73, %p74
      %p77 = scmp.ne.s32.totalorder %s62, %s76
      %p78 = scmp.eq.s32.totalorder %s17, 0
      %p79 = por %p77, %p78
      %s80 = ssub.s32 %s18, %s30
      %s81 = ssub.s32 %s19, %s26
      %s82 = sor.u32 %s80, %s81
      %p83 = scmp.eq.s32.totalorder %s82, 0
      %s85 = sadd.s32 %s84, 1
      %s86 = scalar_select %p83, %s84, %s85
      %p89 = pneg %p83
      %p90 = scmp.eq.s32.totalorder %s11, 1
      %p91 = por %p89, %p90
      %p92 = scmp.ne.s32.totalorder %s84, %s87
      %p93 = scmp.eq.s32.totalorder %s11, 0
      %p94 = por %p92, %p93
      %p95 = scmp.ne.s32.totalorder %s84, %s87
      %p96 = scmp.eq.s32.totalorder %s16, 1
      %p97 = por %p95, %p96
      %p98 = scmp.ne.s32.totalorder %s87, %s88
      %p99 = scmp.eq.s32.totalorder %s16, 0
      %p100 = por %p98, %p99
      %p101 = scmp.ne.s32.totalorder %s87, %s88
      %p102 = scmp.eq.s32.totalorder %s17, 1
      %p103 = por %p101, %p102
      %p105 = scmp.ne.s32.totalorder %s88, %s104
      %p106 = scmp.eq.s32.totalorder %s17, 0
      %p107 = por %p105, %p106
      %p108 = scmp.le.s32.totalorder 1, %s11
      %p109 = scmp.lt.s32.totalorder %s11, 3
      %p110 = pnand %p108, %p109
      %p111 = pneg %p110
      // Predicated region
      $region9: #{tpu_custom_call.1} parent=5 // pred_check
        _
      $region10: #{tpu_custom_call.1} parent=5 // pred_check_branch
        %113 = sbr.rel (%p110) target = $region12
      $region11: #{tpu_custom_call.1} parent=5 // pred_region
        %s114 = ssub.s32 %s11, 1
        // Predicated region
        $region13: #{tpu_custom_call.1} parent=11 // pred_check
          %p115 = pneg %p72
        $region14: #{tpu_custom_call.1} parent=11 // pred_check_branch
          %117 = sbr.rel (%p115) target = $region16
        $region15: #{tpu_custom_call.1} parent=11 // pred_region
          _
        $region16: #{tpu_custom_call.1} parent=11 // pred_fallthru
          _
      $region12: #{tpu_custom_call.1} parent=5 // pred_fallthru
        _
      %p118 = scmp.lt.s32.totalorder %s11, 2
      // Predicated region
      $region17: #{tpu_custom_call.1} parent=5 // pred_check
        %p119 = pneg %p118
      $region18: #{tpu_custom_call.1} parent=5 // pred_check_branch
        %121 = sbr.rel (%p119) target = $region20
      $region19: #{tpu_custom_call.1} parent=5 // pred_region
        // Predicated region
        $region21: #{tpu_custom_call.1} parent=19 // pred_check
          %p122 = pneg %p45
        $region22: #{tpu_custom_call.1} parent=19 // pred_check_branch
          %124 = sbr.rel (%p122) target = $region24
        $region23: #{tpu_custom_call.1} parent=19 // pred_region
          %s125 = smul.u32 16, %s19
          %p126 = scmp.lt.s32.totalorder %s18, 1
          %s127 = scalar_select %p126, %s18, 1
          %p128 = scmp.lt.s32.totalorder %s125, 15
          %s129 = scalar_select %p128, %s125, 15
          %s130 = smul.addr %s127, 16
          %s131 = sadd.s32 %s129, %s130
          %s132 = smul.addr %s131, 8
          %s133 = scalar_lea.vmem %s0, %s132
          %s134 = smul.u32 16, %s19
        $region24: #{tpu_custom_call.1} parent=19 // pred_fallthru
          _
      $region20: #{tpu_custom_call.1} parent=5 // pred_fallthru
        _
      %p135 = scmp.le.s32.totalorder 1, %s11
      %p136 = scmp.lt.s32.totalorder %s11, 3
      %p137 = pnand %p135, %p136
      %p138 = pneg %p137
      // Predicated region
      $region25: #{tpu_custom_call.1} parent=5 // pred_check
        _
      $region26: #{tpu_custom_call.1} parent=5 // pred_check_branch
        %140 = sbr.rel (%p137) target = $region28
      $region27: #{tpu_custom_call.1} parent=5 // pred_region
        %s141 = ssub.s32 %s11, 1
        %s142 = smul.u32 16, %s21
        %p143 = scmp.lt.s32.totalorder %s20, 1
        %s144 = scalar_select %p143, %s20, 1
        %p145 = scmp.lt.s32.totalorder %s142, 15
        %s146 = scalar_select %p145, %s142, 15
        %s147 = smul.addr %s144, 16
        %s148 = sadd.s32 %s146, %s147
        %s149 = smul.addr %s148, 8
        %s150 = scalar_lea.vmem %s0, %s149
        %p151 = pneg %p51
        %p152 = pneg %p48
        %p153 = pneg %p72
        %p154 = pneg %p69
        %p155 = pneg %p100
        %p156 = pneg %p97
        %s157 = sand.u32 %s87, 1
        %s158 = scalar_lea.sflag [#allocation3], %s157
        %s159 = sand.u32 %s87, 1
        %s160 = smul.addr %s159, 64
        %s161 = scalar_lea.vmem [#allocation2], %s160
        %s162 = smul.u32 16, %s21
        %p163 = scmp.lt.s32.totalorder %s20, 1
        %s164 = scalar_select %p163, %s20, 1
        %p165 = scmp.lt.s32.totalorder %s162, 15
        %s166 = scalar_select %p165, %s162, 15
        %s167 = smul.addr %s164, 16
        %s168 = sadd.s32 %s166, %s167
        %s169 = smul.addr %s168, 8
        %s170 = scalar_lea.vmem %s0, %s169
        %s171 = smul.u32 16, %s21
        %s172 = smul.u32 16, %s21
        %v174 = vld [vmem:[%s170] sm:$0xff]
        %v175 = vld [vmem:[%s170 + $0x8] sm:$0xff]
        %v176 = vld [vmem:[%s170 + $0x10] sm:$0xff]
        %v177 = vld [vmem:[%s170 + $0x18] sm:$0xff]
        %v178 = vld [vmem:[%s170 + $0x20] sm:$0xff]
        %v179 = vld [vmem:[%s170 + $0x28] sm:$0xff]
        %v180 = vld [vmem:[%s170 + $0x30] sm:$0xff]
        %v181 = vld [vmem:[%s170 + $0x38] sm:$0xff]
        %v182 = vld [vmem:[%s170 + $0x40] sm:$0xff]
        %v183 = vld [vmem:[%s170 + $0x48] sm:$0xff]
        %v184 = vld [vmem:[%s170 + $0x50] sm:$0xff]
        %v185 = vld [vmem:[%s170 + $0x58] sm:$0xff]
        %v186 = vld [vmem:[%s170 + $0x60] sm:$0xff]
        %v187 = vld [vmem:[%s170 + $0x68] sm:$0xff]
        %v188 = vld [vmem:[%s170 + $0x70] sm:$0xff]
        %v189 = vld [vmem:[%s170 + $0x78] sm:$0xff]
        %v190 = vpack.c.bf16 %v175, %v174
        %v191 = vpack.c.bf16 %v177, %v176
        %v192 = vpack.c.bf16 %v179, %v178
        %v193 = vpack.c.bf16 %v181, %v180
        %v194 = vpack.c.bf16 %v183, %v182
        %v195 = vpack.c.bf16 %v185, %v184
        %v196 = vpack.c.bf16 %v187, %v186
        %v197 = vpack.c.bf16 %v189, %v188
        %v198 = vld [vmem:[%s1] sm:$0xf]
        %v199 = vld [vmem:[%s1 + $0x4] sm:$0xf]
        %v200 = vld [vmem:[%s1 + $0x8] sm:$0xf]
        %v201 = vld [vmem:[%s1 + $0xc] sm:$0xf]
        %v206 = vunpack.c.l.b16 %v198
        %v207 = vunpack.c.l.b16 %v199
        %v208 = vunpack.c.l.b16 %v200
        %v209 = vunpack.c.l.b16 %v201
        %v210 = vpack.c.b16 %v207, %v206
        %v211 = vpack.c.b16 %v209, %v208
        %vm214 = vcmask 261120
        %v216 = vsel %vm214, %v190, 0
        %v219 = vsel %vm214, %v191, 0
        %v222 = vsel %vm214, %v192, 0
        %v225 = vsel %vm214, %v193, 0
        %v228 = vsel %vm214, %v194, 0
        %v231 = vsel %vm214, %v195, 0
        %v234 = vsel %vm214, %v196, 0
        %v237 = vsel %vm214, %v197, 0
        %239 = vmatprep.subr.bf16.mxu0 0
        %240 = vmatpush1.bf16.msra.mxu0 %v210
        %241 = vmatprep.subr.bf16.mxu0 0
        %242 = vmatpush1.bf16.msra.mxu0 %v211
        %243 = vmatprep.subr.bf16.mxu0 0
        %244 = vmatpush1.bf16.msra.mxu0 0
        %245 = vmatprep.subr.bf16.mxu0 0
        %246 = vmatpush1.bf16.msra.mxu0 0
        %247 = vmatprep.subr.bf16.mxu0 0
        %248 = vmatpush1.bf16.msra.mxu0 0
        %249 = vmatprep.subr.bf16.mxu0 0
        %250 = vmatpush1.bf16.msra.mxu0 0
        %251 = vmatprep.subr.bf16.mxu0 0
        %252 = vmatpush1.bf16.msra.mxu0 0
        %253 = vmatprep.subr.bf16.mxu0 0
        %254 = vmatpush1.bf16.msra.mxu0 0
        %255 = vmatprep.subr.bf16.mxu0 0
        %256 = vmatpush1.bf16.msra.mxu0 0
        %257 = vmatprep.subr.bf16.mxu0 0
        %258 = vmatpush1.bf16.msra.mxu0 0
        %259 = vmatprep.subr.bf16.mxu0 0
        %260 = vmatpush1.bf16.msra.mxu0 0
        %261 = vmatprep.subr.bf16.mxu0 0
        %262 = vmatpush1.bf16.msra.mxu0 0
        %263 = vmatprep.subr.bf16.mxu0 0
        %264 = vmatpush1.bf16.msra.mxu0 0
        %265 = vmatprep.subr.bf16.mxu0 0
        %266 = vmatpush1.bf16.msra.mxu0 0
        %267 = vmatprep.subr.bf16.mxu0 0
        %268 = vmatpush1.bf16.msra.mxu0 0
        %269 = vmatprep.subr.bf16.mxu0 0
        %270 = vmatpush1.bf16.msra.mxu0 0
        %271 = vmatprep.mubr.bf16.mxu0 0
        %272 = vmatmul.mubr.bf16.gmra.mrb[0].mxu0 %v216
        %v273 = vpop.f32.mrb[0].mxu0
        %v274 = vadd.f32 0.0, %v273
        %v275 = vpop.f32.mrb[0].mxu0
        %v276 = vpop.f32.mrb[0].mxu0
        %v277 = vadd.f32 0.0, %v276
        %v278 = vpop.f32.mrb[0].mxu0
        %279 = vmatprep.mubr.bf16.mxu0 0
        %280 = vmatmul.mubr.bf16.gmra.mrb[0].mxu0 %v219
        %v281 = vpop.f32.mrb[0].mxu0
        %v282 = vadd.f32 0.0, %v281
        %v283 = vpop.f32.mrb[0].mxu0
        %v284 = vpop.f32.mrb[0].mxu0
        %v285 = vadd.f32 0.0, %v284
        %v286 = vpop.f32.mrb[0].mxu0
        %287 = vmatprep.mubr.bf16.mxu0 0
        %288 = vmatmul.mubr.bf16.gmra.mrb[0].mxu0 %v222
        %v289 = vpop.f32.mrb[0].mxu0
        %v290 = vadd.f32 0.0, %v289
        %v291 = vpop.f32.mrb[0].mxu0
        %v292 = vpop.f32.mrb[0].mxu0
        %v293 = vadd.f32 0.0, %v292
        %v294 = vpop.f32.mrb[0].mxu0
        %295 = vmatprep.mubr.bf16.mxu0 0
        %296 = vmatmul.mubr.bf16.gmra.mrb[0].mxu0 %v225
        %v297 = vpop.f32.mrb[0].mxu0
        %v298 = vadd.f32 0.0, %v297
        %v299 = vpop.f32.mrb[0].mxu0
        %v300 = vpop.f32.mrb[0].mxu0
        %v301 = vadd.f32 0.0, %v300
        %v302 = vpop.f32.mrb[0].mxu0
        %303 = vmatprep.mubr.bf16.mxu0 0
        %304 = vmatmul.mubr.bf16.gmra.mrb[0].mxu0 %v228
        %v305 = vpop.f32.mrb[0].mxu0
        %v306 = vadd.f32 0.0, %v305
        %v307 = vpop.f32.mrb[0].mxu0
        %v308 = vpop.f32.mrb[0].mxu0
        %v309 = vadd.f32 0.0, %v308
        %v310 = vpop.f32.mrb[0].mxu0
        %311 = vmatprep.mubr.bf16.mxu0 0
        %312 = vmatmul.mubr.bf16.gmra.mrb[0].mxu0 %v231
        %v313 = vpop.f32.mrb[0].mxu0
        %v314 = vadd.f32 0.0, %v313
        %v315 = vpop.f32.mrb[0].mxu0
        %v316 = vpop.f32.mrb[0].mxu0
        %v317 = vadd.f32 0.0, %v316
        %v318 = vpop.f32.mrb[0].mxu0
        %319 = vmatprep.mubr.bf16.mxu0 0
        %320 = vmatmul.mubr.bf16.gmra.mrb[0].mxu0 %v234
        %v321 = vpop.f32.mrb[0].mxu0
        %v322 = vadd.f32 0.0, %v321
        %v323 = vpop.f32.mrb[0].mxu0
        %v324 = vpop.f32.mrb[0].mxu0
        %v325 = vadd.f32 0.0, %v324
        %v326 = vpop.f32.mrb[0].mxu0
        %327 = vmatprep.mubr.bf16.mxu0 0
        %328 = vmatmul.mubr.bf16.gmra.mrb[0].mxu0 %v237
        %v329 = vpop.f32.mrb[0].mxu0
        %v330 = vadd.f32 0.0, %v329
        %v331 = vpop.f32.mrb[0].mxu0
        %v332 = vpop.f32.mrb[0].mxu0
        %v333 = vadd.f32 0.0, %v332
        %v334 = vpop.f32.mrb[0].mxu0
        %335 = vdwg.mxu0
        %v336 = vpack.c.bf16 %v277, %v274
        %v337 = vpack.c.bf16 %v285, %v282
        %v338 = vpack.c.bf16 %v293, %v290
        %v339 = vpack.c.bf16 %v301, %v298
        %v340 = vpack.c.bf16 %v309, %v306
        %v341 = vpack.c.bf16 %v317, %v314
        %v342 = vpack.c.bf16 %v325, %v322
        %v343 = vpack.c.bf16 %v333, %v330
        %v352 = vunpack.c.l.b16 %v336
        %v353 = vunpack.c.h.b16 %v336
        %v354 = vunpack.c.l.b16 %v337
        %v355 = vunpack.c.h.b16 %v337
        %v356 = vunpack.c.l.b16 %v338
        %v357 = vunpack.c.h.b16 %v338
        %v358 = vunpack.c.l.b16 %v339
        %v359 = vunpack.c.h.b16 %v339
        %v360 = vunpack.c.l.b16 %v340
        %v361 = vunpack.c.h.b16 %v340
        %v362 = vunpack.c.l.b16 %v341
        %v363 = vunpack.c.h.b16 %v341
        %v364 = vunpack.c.l.b16 %v342
        %v365 = vunpack.c.h.b16 %v342
        %v366 = vunpack.c.l.b16 %v343
        %v367 = vunpack.c.h.b16 %v343
        %v368 = vpack.c.b16 %v352, %v352
        %v369 = vpack.c.b16 %v353, %v353
        %v370 = vpack.c.b16 %v354, %v354
        %v371 = vpack.c.b16 %v355, %v355
        %v372 = vpack.c.b16 %v356, %v356
        %v373 = vpack.c.b16 %v357, %v357
        %v374 = vpack.c.b16 %v358, %v358
        %v375 = vpack.c.b16 %v359, %v359
        %v376 = vpack.c.b16 %v360, %v360
        %v377 = vpack.c.b16 %v361, %v361
        %v378 = vpack.c.b16 %v362, %v362
        %v379 = vpack.c.b16 %v363, %v363
        %v380 = vpack.c.b16 %v364, %v364
        %v381 = vpack.c.b16 %v365, %v365
        %v382 = vpack.c.b16 %v366, %v366
        %v383 = vpack.c.b16 %v367, %v367
        %400 = vst [vmem:[%s161] sm:$0xf] %v368
        %401 = vst [vmem:[%s161 + $0x4] sm:$0xf] %v369
        %402 = vst [vmem:[%s161 + $0x8] sm:$0xf] %v370
        %403 = vst [vmem:[%s161 + $0xc] sm:$0xf] %v371
        %404 = vst [vmem:[%s161 + $0x10] sm:$0xf] %v372
        %405 = vst [vmem:[%s161 + $0x14] sm:$0xf] %v373
        %406 = vst [vmem:[%s161 + $0x18] sm:$0xf] %v374
        %407 = vst [vmem:[%s161 + $0x1c] sm:$0xf] %v375
        %408 = vst [vmem:[%s161 + $0x20] sm:$0xf] %v376
        %409 = vst [vmem:[%s161 + $0x24] sm:$0xf] %v377
        %410 = vst [vmem:[%s161 + $0x28] sm:$0xf] %v378
        %411 = vst [vmem:[%s161 + $0x2c] sm:$0xf] %v379
        %412 = vst [vmem:[%s161 + $0x30] sm:$0xf] %v380
        %413 = vst [vmem:[%s161 + $0x34] sm:$0xf] %v381
        %414 = vst [vmem:[%s161 + $0x38] sm:$0xf] %v382
        %415 = vst [vmem:[%s161 + $0x3c] sm:$0xf] %v383
        %s416 = sand.u32 %s87, 1
        %s417 = scalar_lea.sflag [#allocation3], %s416
        %s418 = sand.u32 %s87, 1
        %s419 = smul.addr %s418, 64
        %s420 = scalar_lea.vmem [#allocation2], %s419
        // Predicated region
        $region29: #{tpu_custom_call.1} parent=27 // pred_check
          %p421 = pneg %p97
        $region30: #{tpu_custom_call.1} parent=27 // pred_check_branch
          %423 = sbr.rel (%p421) target = $region32
        $region31: #{tpu_custom_call.1} parent=27 // pred_region
          %s424 = smul.u32 16, %s21
          %s426 = ssub.s32 1024, 1024
          %427 = vsyncadd %s417, %s426
          %s428 = smul.addr %s20, 16
          %s429 = sadd.s32 %s424, %s428
          %s430 = smul.addr %s429, 64
          %s431 = scalar_lea.hbm %s2, %s430
          %s432 = sshll.u32 %s420, 4
          %s433 = int_to_ptr.vmem [resolvable:$true] %s432
          %438 = dma.vmem_to_hbm [thread:$0]  %s433, 1024, %s431, %s417, 64, 64, 4
        $region32: #{tpu_custom_call.1} parent=27 // pred_fallthru
          _
      $region28: #{tpu_custom_call.1} parent=5 // pred_fallthru
        _
      %p439 = scmp.le.s32.totalorder 2, %s11
      // Predicated region
      $region33: #{tpu_custom_call.1} parent=5 // pred_check
        %p440 = pneg %p439
      $region34: #{tpu_custom_call.1} parent=5 // pred_check_branch
        %442 = sbr.rel (%p440) target = $region36
      $region35: #{tpu_custom_call.1} parent=5 // pred_region
        %s443 = ssub.s32 %s11, 2
        // Predicated region
        $region37: #{tpu_custom_call.1} parent=35 // pred_check
          %p444 = pneg %p103
        $region38: #{tpu_custom_call.1} parent=35 // pred_check_branch
          %446 = sbr.rel (%p444) target = $region40
        $region39: #{tpu_custom_call.1} parent=35 // pred_region
          %s447 = sand.u32 %s88, 1
          %s448 = scalar_lea.sflag [#allocation3], %s447
          %s449 = sand.u32 %s88, 1
          %s450 = smul.addr %s449, 64
          %s451 = scalar_lea.vmem [#allocation2], %s450
          %452 = dma.done %s448, 1024
        $region40: #{tpu_custom_call.1} parent=35 // pred_fallthru
          _
      $region36: #{tpu_custom_call.1} parent=5 // pred_fallthru
        _
    $region6: #{tpu_custom_call.1} parent=1 // loop_footer
      %s15 = sadd.s32 1, %s11
    $region7: #{tpu_custom_call.1} parent=1 // loop_footer_branch
      %10 = sbr.rel target = $region3
    $region8: #{tpu_custom_call.1} parent=1 // loop_exit
      _
    %453 = vsyncpa [#allocation3], 1
    %s454 = scalar_lea.sflag [#allocation3], 1
    %455 = vsyncpa %s454, 1

</llo_original>
